<compile_context>
chip_gen: v7x
topology: tpu7x:2x2x1
jax: 0.10.0
libtpu: 0.0.40
codegen_flags: <defaults>
</compile_context>

<pallas_src>
import jax
import jax.numpy as jnp
import numpy as np
from jax.experimental import pallas as pl
from jax.experimental.pallas import tpu as pltpu

STATE_SIZE = 8
ACTION_SIZE = 4
HIDDEN_SIZES = [128, 64, 32]
HEAD_HIDDEN = HIDDEN_SIZES[-1] // 2          # 16
BN_EPS = 1e-5


# ---------------------------------------------------------------------------
# Kernel: one batch tile [*, TB] per grid step, all weights VMEM-resident.
# ---------------------------------------------------------------------------
def qnet_kernel(x_ref,
                w1_ref, b1_ref,
                w2_ref, b2_ref,
                w3_ref, b3_ref,
                wh_ref, bh_ref,
                wo_ref, bo_ref,
                q_ref):
    """x_ref: [S, TB] bf16.  w*: [out, in] bf16.  b*: [out, 1] f32.  q_ref: [A, TB] f32."""

    def dense(w_ref, b_ref, h_bf16, relu=True):
        acc = jnp.dot(w_ref[...], h_bf16, preferred_element_type=jnp.float32)
        acc = acc + b_ref[...]                      # [out,1] broadcasts across lanes
        return jnp.maximum(acc, 0.0) if relu else acc

    h = dense(w1_ref, b1_ref, x_ref[...])                               # [128, TB]
    h = dense(w2_ref, b2_ref, h.astype(jnp.bfloat16))                   # [ 64, TB]
    h = dense(w3_ref, b3_ref, h.astype(jnp.bfloat16))                   # [ 32, TB]  features
    h = dense(wh_ref, bh_ref, h.astype(jnp.bfloat16))                   # [ 32, TB]  vh|ah fused
    q_ref[...] = dense(wo_ref, bo_ref, h.astype(jnp.bfloat16), relu=False)   # [A, TB]


# ---------------------------------------------------------------------------
# Wrapper: pad batch to a multiple of the tile, run a 1-D parallel grid.
# ---------------------------------------------------------------------------
def qnetwork_forward(x, kernel_params, *, batch_tile=256):
    """x: [B, state_size] f32 -> q: [B, action_size] f32."""
    B = x.shape[0]
    tb = batch_tile
    b_pad = pl.cdiv(B, tb) * tb

    # Lane-dense transposed layout: batch on the 128-lane axis, zero-padded.
    x_t = jnp.zeros((STATE_SIZE, b_pad), jnp.bfloat16)
    x_t = x_t.at[:, :B].set(x.astype(jnp.bfloat16).T)

    def resident(p):                                # weights stay VMEM-resident
        return pl.BlockSpec(p.shape, lambda i: (0, 0))

    in_specs = [pl.BlockSpec((STATE_SIZE, tb), lambda i: (0, i))]
    in_specs += [resident(p) for p in kernel_params]

    weight_bytes = sum(int(np.prod(p.shape)) * p.dtype.itemsize for p in kernel_params)
    flops_per_row = 2 * (STATE_SIZE * 128 + 128 * 64 + 64 * 32 + 32 * 32 + 32 * ACTION_SIZE)
    cost = pl.CostEstimate(
        flops=flops_per_row * b_pad,
        transcendentals=0,
        bytes_accessed=b_pad * (STATE_SIZE * 2 + ACTION_SIZE * 4) + weight_bytes,
    )

    q_t = pl.pallas_call(
        qnet_kernel,
        out_shape=jax.ShapeDtypeStruct((ACTION_SIZE, b_pad), jnp.float32),
        grid=(b_pad // tb,),
        in_specs=in_specs,
        out_specs=pl.BlockSpec((ACTION_SIZE, tb), lambda i: (0, i)),
        compiler_params=pltpu.CompilerParams(
            dimension_semantics=("parallel",),
            vmem_limit_bytes=32 * 1024 * 1024,
        ),
        cost_estimate=cost,
    )(x_t, *kernel_params)

    return q_t[:, :B].T


# ---------------------------------------------------------------------------
# Parameter construction (PyTorch-equivalent raw params) + folding for kernel.
# ---------------------------------------------------------------------------
def _linear_init(key, fan_in, fan_out):
    """PyTorch nn.Linear default init, stored as [in, out] / [out]."""
    kw, kb = jax.random.split(key)
    bound = 1.0 / np.sqrt(fan_in)
    w = jax.random.uniform(kw, (fan_in, fan_out), jnp.float32, -bound, bound)
    b = jax.random.uniform(kb, (fan_out,), jnp.float32, -bound, bound)
    return w, b


def init_raw_params(key):
    """Parameters mirroring the freshly-initialized PyTorch QNetwork (eval mode)."""
    keys = jax.random.split(key, 7)
    trunk = []
    in_dim = STATE_SIZE
    for i, h in enumerate(HIDDEN_SIZES):
        w, b = _linear_init(keys[i], in_dim, h)
        bn = dict(gamma=jnp.ones((h,), jnp.float32),
                  beta=jnp.zeros((h,), jnp.float32),
                  mean=jnp.zeros((h,), jnp.float32),
                  var=jnp.ones((h,), jnp.float32))
        trunk.append((w, b, bn))
        in_dim = h

    wv1, bv1 = _linear_init(keys[3], in_dim, HEAD_HIDDEN)
    wv2, bv2 = _linear_init(keys[4], HEAD_HIDDEN, 1)
    wa1, ba1 = _linear_init(keys[5], in_dim, HEAD_HIDDEN)
    wa2, ba2 = _linear_init(keys[6], HEAD_HIDDEN, ACTION_SIZE)
    heads = dict(wv1=wv1, bv1=bv1, wv2=wv2, bv2=bv2,
                 wa1=wa1, ba1=ba1, wa2=wa2, ba2=ba2)
    return dict(trunk=trunk, heads=heads)


def fold_kernel_params(raw):
    """Fold eval-mode BN into the next Linear, fuse the dueling heads, transpose
    to [out, in] and cast matmul weights to bf16 (biases stay f32, shape [out,1])."""
    (w1, b1, bn1), (w2, b2, bn2), (w3, b3, bn3) = raw["trunk"]
    hd = raw["heads"]

    def bn_affine(bn):
        s = bn["gamma"] / jnp.sqrt(bn["var"] + BN_EPS)
        t = bn["beta"] - bn["mean"] * s
        return s, t

    s1, t1 = bn_affine(bn1)
    s2, t2 = bn_affine(bn2)
    s3, t3 = bn_affine(bn3)

    # BN after layer i folds forward into layer i+1.
    w2f, b2f = w2 * s1[:, None], b2 + t1 @ w2
    w3f, b3f = w3 * s2[:, None], b3 + t2 @ w3

    # Fused head hidden layer [32, 32] = concat(value-hidden, advantage-hidden), BN3 folded in.
    wh = jnp.concatenate([hd["wv1"], hd["wa1"]], axis=1)
    bh = jnp.concatenate([hd["bv1"], hd["ba1"]], axis=0)
    whf, bhf = wh * s3[:, None], bh + t3 @ wh

    # Dueling combine folded into the final weight:
    #   q_j = vh @ wv2 + ah @ (wa2[:, j] - mean_k wa2[:, k]) + (bv2 + ba2_j - mean(ba2))
    wa2c = hd["wa2"] - jnp.mean(hd["wa2"], axis=1, keepdims=True)
    wo = jnp.concatenate([jnp.tile(hd["wv2"], (1, ACTION_SIZE)), wa2c], axis=0)   # [32, A]
    bo = hd["bv2"] + hd["ba2"] - jnp.mean(hd["ba2"])                              # [A]

    def as_kernel(w_in_out, b_out):
        return [w_in_out.T.astype(jnp.bfloat16),             # [out, in] bf16 (MXU operand)
                b_out.reshape(-1, 1).astype(jnp.float32)]     # [out, 1]  f32

    kp = []
    kp += as_kernel(w1, b1)
    kp += as_kernel(w2f, b2f)
    kp += as_kernel(w3f, b3f)
    kp += as_kernel(whf, bhf)
    kp += as_kernel(wo, bo)
    return kp


def reference_forward(x, raw):
    """Pure-JAX f32 replica of QNetwork.forward in eval mode (the spec)."""
    h = x
    for (w, b, bn) in raw["trunk"]:
        h = jnp.maximum(h @ w + b, 0.0)                                           # Linear + ReLU
        h = (h - bn["mean"]) / jnp.sqrt(bn["var"] + BN_EPS) * bn["gamma"] + bn["beta"]  # BN (eval)
        # Dropout: identity in eval mode.
    hd = raw["heads"]
    vh = jnp.maximum(h @ hd["wv1"] + hd["bv1"], 0.0)
    v = vh @ hd["wv2"] + hd["bv2"]
    ah = jnp.maximum(h @ hd["wa1"] + hd["ba1"], 0.0)
    a = ah @ hd["wa2"] + hd["ba2"]
    return v + (a - jnp.mean(a, axis=1, keepdims=True))


if __name__ == "__main__":
    key = jax.random.PRNGKey(0)
    k_params, k_x = jax.random.split(key)

    raw = init_raw_params(k_params)
    kernel_params = fold_kernel_params(raw)

    batch = 2
    x = jax.random.normal(k_x, (batch, STATE_SIZE), jnp.float32)

    q = qnetwork_forward(x, kernel_params, batch_tile=256)
    q = jax.block_until_ready(q)

    q_ref = reference_forward(x, raw)
    # bf16 MXU operands vs f32 reference -> loose tolerance.
    np.testing.assert_allclose(np.asarray(q), np.asarray(q_ref), rtol=5e-2, atol=5e-2)
    assert q.shape == (batch, ACTION_SIZE)

    print("KERNEL_OK")
</pallas_src>

<mosaic_0001>
module attributes {stable_mosaic.version = 11 : i64} {
  func.func @qnet_kernel(%arg0: i32, %arg1: memref<8x256xbf16, #tpu.memory_space<vmem>>, %arg2: memref<128x8xbf16, #tpu.memory_space<vmem>>, %arg3: memref<128x1xf32, #tpu.memory_space<vmem>>, %arg4: memref<64x128xbf16, #tpu.memory_space<vmem>>, %arg5: memref<64x1xf32, #tpu.memory_space<vmem>>, %arg6: memref<32x64xbf16, #tpu.memory_space<vmem>>, %arg7: memref<32x1xf32, #tpu.memory_space<vmem>>, %arg8: memref<32x32xbf16, #tpu.memory_space<vmem>>, %arg9: memref<32x1xf32, #tpu.memory_space<vmem>>, %arg10: memref<4x32xbf16, #tpu.memory_space<vmem>>, %arg11: memref<4x1xf32, #tpu.memory_space<vmem>>, %arg12: memref<4x256xf32, #tpu.memory_space<vmem>>) attributes {dimension_semantics = [#tpu.dimension_semantics<parallel>], iteration_bounds = array<i64: 1>, scalar_prefetch = 0 : i64, scratch_operands = 0 : i64, tpu.core_type = #tpu.core_type<tc>, window_params = [{transform_indices = @transform_0, window_bounds = array<i64: 8, 256>}, {pipeline_mode = #tpu.pipeline_mode<synchronous>, transform_indices = @transform_1, window_bounds = array<i64: 128, 8>}, {pipeline_mode = #tpu.pipeline_mode<synchronous>, transform_indices = @transform_2, window_bounds = array<i64: 128, 1>}, {pipeline_mode = #tpu.pipeline_mode<synchronous>, transform_indices = @transform_3, window_bounds = array<i64: 64, 128>}, {pipeline_mode = #tpu.pipeline_mode<synchronous>, transform_indices = @transform_4, window_bounds = array<i64: 64, 1>}, {pipeline_mode = #tpu.pipeline_mode<synchronous>, transform_indices = @transform_5, window_bounds = array<i64: 32, 64>}, {pipeline_mode = #tpu.pipeline_mode<synchronous>, transform_indices = @transform_6, window_bounds = array<i64: 32, 1>}, {pipeline_mode = #tpu.pipeline_mode<synchronous>, transform_indices = @transform_7, window_bounds = array<i64: 32, 32>}, {pipeline_mode = #tpu.pipeline_mode<synchronous>, transform_indices = @transform_8, window_bounds = array<i64: 32, 1>}, {pipeline_mode = #tpu.pipeline_mode<synchronous>, transform_indices = @transform_9, window_bounds = array<i64: 4, 32>}, {pipeline_mode = #tpu.pipeline_mode<synchronous>, transform_indices = @transform_10, window_bounds = array<i64: 4, 1>}, {transform_indices = @transform_11, window_bounds = array<i64: 4, 256>}]} {
    %c0 = arith.constant 0 : index
    %c0_0 = arith.constant 0 : index
    %0 = vector.load %arg1[%c0, %c0_0] : memref<8x256xbf16, #tpu.memory_space<vmem>>, vector<8x256xbf16>
    %c0_1 = arith.constant 0 : index
    %c0_2 = arith.constant 0 : index
    %1 = vector.load %arg2[%c0_1, %c0_2] : memref<128x8xbf16, #tpu.memory_space<vmem>>, vector<128x8xbf16>
    %cst = arith.constant dense<0.000000e+00> : vector<128x256xf32>
    %2 = tpu.matmul %1, %0, %cst {dimension_numbers = #tpu.dot_dimension_numbers<[1], [0], [0], [1], [0, 0, 1, 1], [], []>} : vector<128x8xbf16>, vector<8x256xbf16>, vector<128x256xf32> -> vector<128x256xf32>
    %c0_3 = arith.constant 0 : index
    %c0_4 = arith.constant 0 : index
    %3 = vector.load %arg3[%c0_3, %c0_4] : memref<128x1xf32, #tpu.memory_space<vmem>>, vector<128x1xf32>
    %4 = vector.broadcast %3 : vector<128x1xf32> to vector<128x256xf32>
    %5 = arith.addf %2, %4 : vector<128x256xf32>
    %cst_5 = arith.constant 0.000000e+00 : f32
    %6 = vector.broadcast %cst_5 : f32 to vector<128x256xf32>
    %7 = arith.maximumf %5, %6 : vector<128x256xf32>
    %8 = arith.truncf %7 : vector<128x256xf32> to vector<128x256xbf16>
    %c0_6 = arith.constant 0 : index
    %c0_7 = arith.constant 0 : index
    %9 = vector.load %arg4[%c0_6, %c0_7] : memref<64x128xbf16, #tpu.memory_space<vmem>>, vector<64x128xbf16>
    %cst_8 = arith.constant dense<0.000000e+00> : vector<64x256xf32>
    %10 = tpu.matmul %9, %8, %cst_8 {dimension_numbers = #tpu.dot_dimension_numbers<[1], [0], [0], [1], [0, 0, 1, 1], [], []>} : vector<64x128xbf16>, vector<128x256xbf16>, vector<64x256xf32> -> vector<64x256xf32>
    %c0_9 = arith.constant 0 : index
    %c0_10 = arith.constant 0 : index
    %11 = vector.load %arg5[%c0_9, %c0_10] : memref<64x1xf32, #tpu.memory_space<vmem>>, vector<64x1xf32>
    %12 = vector.broadcast %11 : vector<64x1xf32> to vector<64x256xf32>
    %13 = arith.addf %10, %12 : vector<64x256xf32>
    %cst_11 = arith.constant 0.000000e+00 : f32
    %14 = vector.broadcast %cst_11 : f32 to vector<64x256xf32>
    %15 = arith.maximumf %13, %14 : vector<64x256xf32>
    %16 = arith.truncf %15 : vector<64x256xf32> to vector<64x256xbf16>
    %c0_12 = arith.constant 0 : index
    %c0_13 = arith.constant 0 : index
    %17 = vector.load %arg6[%c0_12, %c0_13] : memref<32x64xbf16, #tpu.memory_space<vmem>>, vector<32x64xbf16>
    %cst_14 = arith.constant dense<0.000000e+00> : vector<32x256xf32>
    %18 = tpu.matmul %17, %16, %cst_14 {dimension_numbers = #tpu.dot_dimension_numbers<[1], [0], [0], [1], [0, 0, 1, 1], [], []>} : vector<32x64xbf16>, vector<64x256xbf16>, vector<32x256xf32> -> vector<32x256xf32>
    %c0_15 = arith.constant 0 : index
    %c0_16 = arith.constant 0 : index
    %19 = vector.load %arg7[%c0_15, %c0_16] : memref<32x1xf32, #tpu.memory_space<vmem>>, vector<32x1xf32>
    %20 = vector.broadcast %19 : vector<32x1xf32> to vector<32x256xf32>
    %21 = arith.addf %18, %20 : vector<32x256xf32>
    %cst_17 = arith.constant 0.000000e+00 : f32
    %22 = vector.broadcast %cst_17 : f32 to vector<32x256xf32>
    %23 = arith.maximumf %21, %22 : vector<32x256xf32>
    %24 = arith.truncf %23 : vector<32x256xf32> to vector<32x256xbf16>
    %c0_18 = arith.constant 0 : index
    %c0_19 = arith.constant 0 : index
    %25 = vector.load %arg8[%c0_18, %c0_19] : memref<32x32xbf16, #tpu.memory_space<vmem>>, vector<32x32xbf16>
    %cst_20 = arith.constant dense<0.000000e+00> : vector<32x256xf32>
    %26 = tpu.matmul %25, %24, %cst_20 {dimension_numbers = #tpu.dot_dimension_numbers<[1], [0], [0], [1], [0, 0, 1, 1], [], []>} : vector<32x32xbf16>, vector<32x256xbf16>, vector<32x256xf32> -> vector<32x256xf32>
    %c0_21 = arith.constant 0 : index
    %c0_22 = arith.constant 0 : index
    %27 = vector.load %arg9[%c0_21, %c0_22] : memref<32x1xf32, #tpu.memory_space<vmem>>, vector<32x1xf32>
    %28 = vector.broadcast %27 : vector<32x1xf32> to vector<32x256xf32>
    %29 = arith.addf %26, %28 : vector<32x256xf32>
    %cst_23 = arith.constant 0.000000e+00 : f32
    %30 = vector.broadcast %cst_23 : f32 to vector<32x256xf32>
    %31 = arith.maximumf %29, %30 : vector<32x256xf32>
    %32 = arith.truncf %31 : vector<32x256xf32> to vector<32x256xbf16>
    %c0_24 = arith.constant 0 : index
    %c0_25 = arith.constant 0 : index
    %33 = vector.load %arg10[%c0_24, %c0_25] : memref<4x32xbf16, #tpu.memory_space<vmem>>, vector<4x32xbf16>
    %cst_26 = arith.constant dense<0.000000e+00> : vector<4x256xf32>
    %34 = tpu.matmul %33, %32, %cst_26 {dimension_numbers = #tpu.dot_dimension_numbers<[1], [0], [0], [1], [0, 0, 1, 1], [], []>} : vector<4x32xbf16>, vector<32x256xbf16>, vector<4x256xf32> -> vector<4x256xf32>
    %c0_27 = arith.constant 0 : index
    %c0_28 = arith.constant 0 : index
    %35 = vector.load %arg11[%c0_27, %c0_28] : memref<4x1xf32, #tpu.memory_space<vmem>>, vector<4x1xf32>
    %36 = vector.broadcast %35 : vector<4x1xf32> to vector<4x256xf32>
    %37 = arith.addf %34, %36 : vector<4x256xf32>
    %c0_29 = arith.constant 0 : index
    %c0_30 = arith.constant 0 : index
    %38 = vector.load %arg12[%c0_29, %c0_30] : memref<4x256xf32, #tpu.memory_space<vmem>>, vector<4x256xf32>
    tpu.vector_store %arg12[%c0_29, %c0_30], %37 {strides = array<i32>} : memref<4x256xf32, #tpu.memory_space<vmem>>, vector<4x256xf32>,
    return
  }
  func.func @transform_0(%arg0: i32) -> (i32, i32) {
    %c0_i32 = arith.constant 0 : i32
    %c0_i32_0 = arith.constant 0 : i32
    return %c0_i32, %arg0 : i32, i32
  }
  func.func @transform_1(%arg0: i32) -> (i32, i32) {
    %c0_i32 = arith.constant 0 : i32
    %c0_i32_0 = arith.constant 0 : i32
    %c0_i32_1 = arith.constant 0 : i32
    return %c0_i32, %c0_i32_0 : i32, i32
  }
  func.func @transform_2(%arg0: i32) -> (i32, i32) {
    %c0_i32 = arith.constant 0 : i32
    %c0_i32_0 = arith.constant 0 : i32
    %c0_i32_1 = arith.constant 0 : i32
    return %c0_i32, %c0_i32_0 : i32, i32
  }
  func.func @transform_3(%arg0: i32) -> (i32, i32) {
    %c0_i32 = arith.constant 0 : i32
    %c0_i32_0 = arith.constant 0 : i32
    %c0_i32_1 = arith.constant 0 : i32
    return %c0_i32, %c0_i32_0 : i32, i32
  }
  func.func @transform_4(%arg0: i32) -> (i32, i32) {
    %c0_i32 = arith.constant 0 : i32
    %c0_i32_0 = arith.constant 0 : i32
    %c0_i32_1 = arith.constant 0 : i32
    return %c0_i32, %c0_i32_0 : i32, i32
  }
  func.func @transform_5(%arg0: i32) -> (i32, i32) {
    %c0_i32 = arith.constant 0 : i32
    %c0_i32_0 = arith.constant 0 : i32
    %c0_i32_1 = arith.constant 0 : i32
    return %c0_i32, %c0_i32_0 : i32, i32
  }
  func.func @transform_6(%arg0: i32) -> (i32, i32) {
    %c0_i32 = arith.constant 0 : i32
    %c0_i32_0 = arith.constant 0 : i32
    %c0_i32_1 = arith.constant 0 : i32
    return %c0_i32, %c0_i32_0 : i32, i32
  }
  func.func @transform_7(%arg0: i32) -> (i32, i32) {
    %c0_i32 = arith.constant 0 : i32
    %c0_i32_0 = arith.constant 0 : i32
    %c0_i32_1 = arith.constant 0 : i32
    return %c0_i32, %c0_i32_0 : i32, i32
  }
  func.func @transform_8(%arg0: i32) -> (i32, i32) {
    %c0_i32 = arith.constant 0 : i32
    %c0_i32_0 = arith.constant 0 : i32
    %c0_i32_1 = arith.constant 0 : i32
    return %c0_i32, %c0_i32_0 : i32, i32
  }
  func.func @transform_9(%arg0: i32) -> (i32, i32) {
    %c0_i32 = arith.constant 0 : i32
    %c0_i32_0 = arith.constant 0 : i32
    %c0_i32_1 = arith.constant 0 : i32
    return %c0_i32, %c0_i32_0 : i32, i32
  }
  func.func @transform_10(%arg0: i32) -> (i32, i32) {
    %c0_i32 = arith.constant 0 : i32
    %c0_i32_0 = arith.constant 0 : i32
    %c0_i32_1 = arith.constant 0 : i32
    return %c0_i32, %c0_i32_0 : i32, i32
  }
  func.func @transform_11(%arg0: i32) -> (i32, i32) {
    %c0_i32 = arith.constant 0 : i32
    %c0_i32_0 = arith.constant 0 : i32
    return %c0_i32, %arg0 : i32, i32
  }
}

</mosaic_0001>

<llo_original>
// kernel: tpu_custom_call.1
$region0: #{tpu_custom_call.1}
  #allocation0 [shape = 'u32[]', space=smem, size = 0x4, offset = 0x4, fixed_abs, tag = 'smem constant byte address 0x4 - core index']
  #allocation1 [shape = 'u32[144,128]{1,0:T(1,128)}', space=vmem, size = 0x12000, scoped, tag = 'internal scratch']
  %s0 = inlined_call_operand.vmem [shape: bf16[8,256], index: 0, kind: input, shape index: {}]
  %s1 = inlined_call_operand.vmem [shape: bf16[128,8], index: 1, kind: input, shape index: {}]
  %s2 = inlined_call_operand.vmem [shape: f32[128,1], index: 2, kind: input, shape index: {}]
  %s3 = inlined_call_operand.vmem [shape: bf16[64,128], index: 3, kind: input, shape index: {}]
  %s4 = inlined_call_operand.vmem [shape: f32[64,1], index: 4, kind: input, shape index: {}]
  %s5 = inlined_call_operand.vmem [shape: bf16[32,64], index: 5, kind: input, shape index: {}]
  %s6 = inlined_call_operand.vmem [shape: f32[32,1], index: 6, kind: input, shape index: {}]
  %s7 = inlined_call_operand.vmem [shape: bf16[32,32], index: 7, kind: input, shape index: {}]
  %s8 = inlined_call_operand.vmem [shape: f32[32,1], index: 8, kind: input, shape index: {}]
  %s9 = inlined_call_operand.vmem [shape: bf16[4,32], index: 9, kind: input, shape index: {}]
  %s10 = inlined_call_operand.vmem [shape: f32[4,1], index: 10, kind: input, shape index: {}]
  %s11 = inlined_call_operand.hbm [shape: f32[4,256], index: 11, kind: output, shape index: {}]
  %s12 = sld [smem:[#allocation0]]
  $region54: #{tpu_custom_call.1} parent=0
    _
  %s14 = ssub.s32 1, %s12
  %s15 = scalar_select 0, %s14, %s12
  $region1: #{tpu_custom_call.1} parent=0
    #allocation2 [shape = 'u8[4096]{0}', space=vmem, size = 0x1000, scoped, tag = 'output window, operand 0, single buffered']
    #allocation3 [shape = 's32[1]{0}', space=sflag, size = 0x4, scoped, tag = 'scoped memory for tpu_custom_call.1']
    %16 = vsyncpa [#allocation3], 0
    // Predicated region
    $region2: #{tpu_custom_call.1} parent=1 // pred_check
      _
    $region3: #{tpu_custom_call.1} parent=1 // pred_check_branch
      %18 = sbr.rel (0) target = $region5
    $region4: #{tpu_custom_call.1} parent=1 // pred_region
      _
    $region5: #{tpu_custom_call.1} parent=1 // pred_fallthru
      _
    // Predicated region
    $region6: #{tpu_custom_call.1} parent=1 // pred_check
      _
    $region7: #{tpu_custom_call.1} parent=1 // pred_check_branch
      %20 = sbr.rel (0) target = $region9
    $region8: #{tpu_custom_call.1} parent=1 // pred_region
      _
    $region9: #{tpu_custom_call.1} parent=1 // pred_fallthru
      _
    // Predicated region
    $region10: #{tpu_custom_call.1} parent=1 // pred_check
      _
    $region11: #{tpu_custom_call.1} parent=1 // pred_check_branch
      %22 = sbr.rel (0) target = $region13
    $region12: #{tpu_custom_call.1} parent=1 // pred_region
      _
    $region13: #{tpu_custom_call.1} parent=1 // pred_fallthru
      _
    // Predicated region
    $region14: #{tpu_custom_call.1} parent=1 // pred_check
      _
    $region15: #{tpu_custom_call.1} parent=1 // pred_check_branch
      %24 = sbr.rel (0) target = $region17
    $region16: #{tpu_custom_call.1} parent=1 // pred_region
      _
    $region17: #{tpu_custom_call.1} parent=1 // pred_fallthru
      _
    // Predicated region
    $region18: #{tpu_custom_call.1} parent=1 // pred_check
      _
    $region19: #{tpu_custom_call.1} parent=1 // pred_check_branch
      %26 = sbr.rel (0) target = $region21
    $region20: #{tpu_custom_call.1} parent=1 // pred_region
      _
    $region21: #{tpu_custom_call.1} parent=1 // pred_fallthru
      _
    // Predicated region
    $region22: #{tpu_custom_call.1} parent=1 // pred_check
      _
    $region23: #{tpu_custom_call.1} parent=1 // pred_check_branch
      %28 = sbr.rel (0) target = $region25
    $region24: #{tpu_custom_call.1} parent=1 // pred_region
      _
    $region25: #{tpu_custom_call.1} parent=1 // pred_fallthru
      _
    // Predicated region
    $region26: #{tpu_custom_call.1} parent=1 // pred_check
      _
    $region27: #{tpu_custom_call.1} parent=1 // pred_check_branch
      %30 = sbr.rel (0) target = $region29
    $region28: #{tpu_custom_call.1} parent=1 // pred_region
      _
    $region29: #{tpu_custom_call.1} parent=1 // pred_fallthru
      _
    // Predicated region
    $region30: #{tpu_custom_call.1} parent=1 // pred_check
      _
    $region31: #{tpu_custom_call.1} parent=1 // pred_check_branch
      %32 = sbr.rel (0) target = $region33
    $region32: #{tpu_custom_call.1} parent=1 // pred_region
      _
    $region33: #{tpu_custom_call.1} parent=1 // pred_fallthru
      _
    // Predicated region
    $region34: #{tpu_custom_call.1} parent=1 // pred_check
      _
    $region35: #{tpu_custom_call.1} parent=1 // pred_check_branch
      %34 = sbr.rel (0) target = $region37
    $region36: #{tpu_custom_call.1} parent=1 // pred_region
      _
    $region37: #{tpu_custom_call.1} parent=1 // pred_fallthru
      _
    // Predicated region
    $region38: #{tpu_custom_call.1} parent=1 // pred_check
      _
    $region39: #{tpu_custom_call.1} parent=1 // pred_check_branch
      %36 = sbr.rel (0) target = $region41
    $region40: #{tpu_custom_call.1} parent=1 // pred_region
      _
    $region41: #{tpu_custom_call.1} parent=1 // pred_fallthru
      _
    // Predicated region
    $region42: #{tpu_custom_call.1} parent=1 // pred_check
      _
    $region43: #{tpu_custom_call.1} parent=1 // pred_check_branch
      %38 = sbr.rel (0) target = $region45
    $region44: #{tpu_custom_call.1} parent=1 // pred_region
      _
    $region45: #{tpu_custom_call.1} parent=1 // pred_fallthru
      _
    %v40 = vld [vmem:[%s0] sm:$0xff]
    %v41 = vld [vmem:[%s1] sm:$0xf]
    %v42 = vld [vmem:[%s1 + $0x4] sm:$0xf]
    %v43 = vld [vmem:[%s1 + $0x8] sm:$0xf]
    %v44 = vld [vmem:[%s1 + $0xc] sm:$0xf]
    %v45 = vld [vmem:[%s1 + $0x10] sm:$0xf]
    %v46 = vld [vmem:[%s1 + $0x14] sm:$0xf]
    %v47 = vld [vmem:[%s1 + $0x18] sm:$0xf]
    %v48 = vld [vmem:[%s1 + $0x1c] sm:$0xf]
    %v49 = vld [vmem:[%s1 + $0x20] sm:$0xf]
    %v50 = vld [vmem:[%s1 + $0x24] sm:$0xf]
    %v51 = vld [vmem:[%s1 + $0x28] sm:$0xf]
    %v52 = vld [vmem:[%s1 + $0x2c] sm:$0xf]
    %v53 = vld [vmem:[%s1 + $0x30] sm:$0xf]
    %v54 = vld [vmem:[%s1 + $0x34] sm:$0xf]
    %v55 = vld [vmem:[%s1 + $0x38] sm:$0xf]
    %v56 = vld [vmem:[%s1 + $0x3c] sm:$0xf]
    %v57 = vld [vmem:[%s2] sm:$0xff]
    %v58 = vld [vmem:[%s2 + $0x8] sm:$0xff]
    %v59 = vld [vmem:[%s2 + $0x10] sm:$0xff]
    %v60 = vld [vmem:[%s2 + $0x18] sm:$0xff]
    %v61 = vld [vmem:[%s2 + $0x20] sm:$0xff]
    %v62 = vld [vmem:[%s2 + $0x28] sm:$0xff]
    %v63 = vld [vmem:[%s2 + $0x30] sm:$0xff]
    %v64 = vld [vmem:[%s2 + $0x38] sm:$0xff]
    %v65 = vld [vmem:[%s2 + $0x40] sm:$0xff]
    %v66 = vld [vmem:[%s2 + $0x48] sm:$0xff]
    %v67 = vld [vmem:[%s2 + $0x50] sm:$0xff]
    %v68 = vld [vmem:[%s2 + $0x58] sm:$0xff]
    %v69 = vld [vmem:[%s2 + $0x60] sm:$0xff]
    %v70 = vld [vmem:[%s2 + $0x68] sm:$0xff]
    %v71 = vld [vmem:[%s2 + $0x70] sm:$0xff]
    %v72 = vld [vmem:[%s2 + $0x78] sm:$0xff]
    %74 = vset.pattern.permute.xlu0 0
    %75 = vperm.xlu0 %74, %v57
    %v76 = vpop.permute.xlu0 %75
    %79 = vset.pattern.permute.xlu0 0
    %80 = vperm.xlu0 %79, %v58
    %v81 = vpop.permute.xlu0 %80
    %84 = vset.pattern.permute.xlu0 0
    %85 = vperm.xlu0 %84, %v59
    %v86 = vpop.permute.xlu0 %85
    %89 = vset.pattern.permute.xlu0 0
    %90 = vperm.xlu0 %89, %v60
    %v91 = vpop.permute.xlu0 %90
    %94 = vset.pattern.permute.xlu0 0
    %95 = vperm.xlu0 %94, %v61
    %v96 = vpop.permute.xlu0 %95
    %99 = vset.pattern.permute.xlu0 0
    %100 = vperm.xlu0 %99, %v62
    %v101 = vpop.permute.xlu0 %100
    %104 = vset.pattern.permute.xlu0 0
    %105 = vperm.xlu0 %104, %v63
    %v106 = vpop.permute.xlu0 %105
    %109 = vset.pattern.permute.xlu0 0
    %110 = vperm.xlu0 %109, %v64
    %v111 = vpop.permute.xlu0 %110
    %114 = vset.pattern.permute.xlu0 0
    %115 = vperm.xlu0 %114, %v65
    %v116 = vpop.permute.xlu0 %115
    %119 = vset.pattern.permute.xlu0 0
    %120 = vperm.xlu0 %119, %v66
    %v121 = vpop.permute.xlu0 %120
    %124 = vset.pattern.permute.xlu0 0
    %125 = vperm.xlu0 %124, %v67
    %v126 = vpop.permute.xlu0 %125
    %129 = vset.pattern.permute.xlu0 0
    %130 = vperm.xlu0 %129, %v68
    %v131 = vpop.permute.xlu0 %130
    %134 = vset.pattern.permute.xlu0 0
    %135 = vperm.xlu0 %134, %v69
    %v136 = vpop.permute.xlu0 %135
    %139 = vset.pattern.permute.xlu0 0
    %140 = vperm.xlu0 %139, %v70
    %v141 = vpop.permute.xlu0 %140
    %144 = vset.pattern.permute.xlu0 0
    %145 = vperm.xlu0 %144, %v71
    %v146 = vpop.permute.xlu0 %145
    %149 = vset.pattern.permute.xlu0 0
    %150 = vperm.xlu0 %149, %v72
    %v151 = vpop.permute.xlu0 %150
    %v169 = vunpack.c.l.b16 %v41
    %v170 = vunpack.c.l.b16 %v42
    %v171 = vunpack.c.l.b16 %v43
    %v172 = vunpack.c.l.b16 %v44
    %v173 = vunpack.c.l.b16 %v45
    %v174 = vunpack.c.l.b16 %v46
    %v175 = vunpack.c.l.b16 %v47
    %v176 = vunpack.c.l.b16 %v48
    %v177 = vunpack.c.l.b16 %v49
    %v178 = vunpack.c.l.b16 %v50
    %v179 = vunpack.c.l.b16 %v51
    %v180 = vunpack.c.l.b16 %v52
    %v181 = vunpack.c.l.b16 %v53
    %v182 = vunpack.c.l.b16 %v54
    %v183 = vunpack.c.l.b16 %v55
    %v184 = vunpack.c.l.b16 %v56
    %v185 = vpack.c.b16 %v170, %v169
    %v186 = vpack.c.b16 %v172, %v171
    %v187 = vpack.c.b16 %v174, %v173
    %v188 = vpack.c.b16 %v176, %v175
    %v189 = vpack.c.b16 %v178, %v177
    %v190 = vpack.c.b16 %v180, %v179
    %v191 = vpack.c.b16 %v182, %v181
    %v192 = vpack.c.b16 %v184, %v183
    %v194 = vunpack.c.l.b16 %v40
    %v195 = vunpack.c.h.b16 %v40
    %v196 = vpack.c.b16 %v194, %v194
    %v197 = vpack.c.b16 %v195, %v195
    %vm198 = vcmask 64512
    %v200 = vsel %vm198, %v185, 0
    %v203 = vsel %vm198, %v186, 0
    %v206 = vsel %vm198, %v187, 0
    %v209 = vsel %vm198, %v188, 0
    %v212 = vsel %vm198, %v189, 0
    %v215 = vsel %vm198, %v190, 0
    %v218 = vsel %vm198, %v191, 0
    %v221 = vsel %vm198, %v192, 0
    %vm223 = vcmask 1043456
    %v225 = vsel %vm223, %v196, 0
    %v228 = vsel %vm223, %v197, 0
    %230 = vmatprep.subr.bf16.mxu0 %v228
    %231 = vmatpush1.bf16.msra.mxu0 %v225
    %232 = vmatprep.subr.bf16.mxu0 0
    %233 = vmatpush1.bf16.msra.mxu0 0
    %234 = vmatprep.subr.bf16.mxu0 0
    %235 = vmatpush1.bf16.msra.mxu0 0
    %236 = vmatprep.subr.bf16.mxu0 0
    %237 = vmatpush1.bf16.msra.mxu0 0
    %238 = vmatprep.subr.bf16.mxu0 0
    %239 = vmatpush1.bf16.msra.mxu0 0
    %240 = vmatprep.subr.bf16.mxu0 0
    %241 = vmatpush1.bf16.msra.mxu0 0
    %242 = vmatprep.subr.bf16.mxu0 0
    %243 = vmatpush1.bf16.msra.mxu0 0
    %244 = vmatprep.subr.bf16.mxu0 0
    %245 = vmatpush1.bf16.msra.mxu0 0
    %246 = vmatprep.subr.bf16.mxu0 0
    %247 = vmatpush1.bf16.msra.mxu0 0
    %248 = vmatprep.subr.bf16.mxu0 0
    %249 = vmatpush1.bf16.msra.mxu0 0
    %250 = vmatprep.subr.bf16.mxu0 0
    %251 = vmatpush1.bf16.msra.mxu0 0
    %252 = vmatprep.subr.bf16.mxu0 0
    %253 = vmatpush1.bf16.msra.mxu0 0
    %254 = vmatprep.subr.bf16.mxu0 0
    %255 = vmatpush1.bf16.msra.mxu0 0
    %256 = vmatprep.subr.bf16.mxu0 0
    %257 = vmatpush1.bf16.msra.mxu0 0
    %258 = vmatprep.subr.bf16.mxu0 0
    %259 = vmatpush1.bf16.msra.mxu0 0
    %260 = vmatprep.subr.bf16.mxu0 0
    %261 = vmatpush1.bf16.msra.mxu0 0
    %262 = vmatprep.mubr.bf16.mxu0 0
    %263 = vmatmul.mubr.bf16.gmra.mrb[0].mxu0 %v200
    %v264 = vpop.f32.mrb[0].mxu0
    %v265 = vadd.f32 %v76, %v264
    %v266 = vpop.f32.mrb[0].mxu0
    %v267 = vadd.f32 %v76, %v266
    %v268 = vpop.f32.mrb[0].mxu0
    %v269 = vadd.f32 %v81, %v268
    %v270 = vpop.f32.mrb[0].mxu0
    %v271 = vadd.f32 %v81, %v270
    %272 = vmatprep.mubr.bf16.mxu0 0
    %273 = vmatmul.mubr.bf16.gmra.mrb[0].mxu0 %v203
    %v274 = vpop.f32.mrb[0].mxu0
    %v275 = vadd.f32 %v86, %v274
    %v276 = vpop.f32.mrb[0].mxu0
    %v277 = vadd.f32 %v86, %v276
    %v278 = vpop.f32.mrb[0].mxu0
    %v279 = vadd.f32 %v91, %v278
    %v280 = vpop.f32.mrb[0].mxu0
    %v281 = vadd.f32 %v91, %v280
    %282 = vmatprep.mubr.bf16.mxu0 0
    %283 = vmatmul.mubr.bf16.gmra.mrb[0].mxu0 %v206
    %v284 = vpop.f32.mrb[0].mxu0
    %v285 = vadd.f32 %v96, %v284
    %v286 = vpop.f32.mrb[0].mxu0
    %v287 = vadd.f32 %v96, %v286
    %v288 = vpop.f32.mrb[0].mxu0
    %v289 = vadd.f32 %v101, %v288
    %v290 = vpop.f32.mrb[0].mxu0
    %v291 = vadd.f32 %v101, %v290
    %292 = vmatprep.mubr.bf16.mxu0 0
    %293 = vmatmul.mubr.bf16.gmra.mrb[0].mxu0 %v209
    %v294 = vpop.f32.mrb[0].mxu0
    %v295 = vadd.f32 %v106, %v294
    %v296 = vpop.f32.mrb[0].mxu0
    %v297 = vadd.f32 %v106, %v296
    %v298 = vpop.f32.mrb[0].mxu0
    %v299 = vadd.f32 %v111, %v298
    %v300 = vpop.f32.mrb[0].mxu0
    %v301 = vadd.f32 %v111, %v300
    %302 = vmatprep.mubr.bf16.mxu0 0
    %303 = vmatmul.mubr.bf16.gmra.mrb[0].mxu0 %v212
    %v304 = vpop.f32.mrb[0].mxu0
    %v305 = vadd.f32 %v116, %v304
    %v306 = vpop.f32.mrb[0].mxu0
    %v307 = vadd.f32 %v116, %v306
    %v308 = vpop.f32.mrb[0].mxu0
    %v309 = vadd.f32 %v121, %v308
    %v310 = vpop.f32.mrb[0].mxu0
    %v311 = vadd.f32 %v121, %v310
    %312 = vmatprep.mubr.bf16.mxu0 0
    %313 = vmatmul.mubr.bf16.gmra.mrb[0].mxu0 %v215
    %v314 = vpop.f32.mrb[0].mxu0
    %v315 = vadd.f32 %v126, %v314
    %v316 = vpop.f32.mrb[0].mxu0
    %v317 = vadd.f32 %v126, %v316
    %v318 = vpop.f32.mrb[0].mxu0
    %v319 = vadd.f32 %v131, %v318
    %v320 = vpop.f32.mrb[0].mxu0
    %v321 = vadd.f32 %v131, %v320
    %322 = vmatprep.mubr.bf16.mxu0 0
    %323 = vmatmul.mubr.bf16.gmra.mrb[0].mxu0 %v218
    %v324 = vpop.f32.mrb[0].mxu0
    %v325 = vadd.f32 %v136, %v324
    %v326 = vpop.f32.mrb[0].mxu0
    %v327 = vadd.f32 %v136, %v326
    %v328 = vpop.f32.mrb[0].mxu0
    %v329 = vadd.f32 %v141, %v328
    %v330 = vpop.f32.mrb[0].mxu0
    %v331 = vadd.f32 %v141, %v330
    %332 = vmatprep.mubr.bf16.mxu0 0
    %333 = vmatmul.mubr.bf16.gmra.mrb[0].mxu0 %v221
    %v334 = vpop.f32.mrb[0].mxu0
    %v335 = vadd.f32 %v146, %v334
    %v336 = vpop.f32.mrb[0].mxu0
    %v337 = vadd.f32 %v146, %v336
    %v338 = vpop.f32.mrb[0].mxu0
    %v339 = vadd.f32 %v151, %v338
    %v340 = vpop.f32.mrb[0].mxu0
    %v341 = vadd.f32 %v151, %v340
    %342 = vdwg.mxu0
    %v343 = vmax.f32 %v265, 0.0
    %v344 = vmax.f32 %v267, 0.0
    %v345 = vmax.f32 %v269, 0.0
    %v346 = vmax.f32 %v271, 0.0
    %v347 = vmax.f32 %v275, 0.0
    %v348 = vmax.f32 %v277, 0.0
    %v349 = vmax.f32 %v279, 0.0
    %v350 = vmax.f32 %v281, 0.0
    %v351 = vmax.f32 %v285, 0.0
    %v352 = vmax.f32 %v287, 0.0
    %v353 = vmax.f32 %v289, 0.0
    %v354 = vmax.f32 %v291, 0.0
    %v355 = vmax.f32 %v295, 0.0
    %v356 = vmax.f32 %v297, 0.0
    %v357 = vmax.f32 %v299, 0.0
    %v358 = vmax.f32 %v301, 0.0
    %v359 = vmax.f32 %v305, 0.0
    %v360 = vmax.f32 %v307, 0.0
    %v361 = vmax.f32 %v309, 0.0
    %v362 = vmax.f32 %v311, 0.0
    %v363 = vmax.f32 %v315, 0.0
    %v364 = vmax.f32 %v317, 0.0
    %v365 = vmax.f32 %v319, 0.0
    %v366 = vmax.f32 %v321, 0.0
    %v367 = vmax.f32 %v325, 0.0
    %v368 = vmax.f32 %v327, 0.0
    %v369 = vmax.f32 %v329, 0.0
    %v370 = vmax.f32 %v331, 0.0
    %v371 = vmax.f32 %v335, 0.0
    %v372 = vmax.f32 %v337, 0.0
    %v373 = vmax.f32 %v339, 0.0
    %v374 = vmax.f32 %v341, 0.0
    %v375 = vpack.c.bf16 %v345, %v343
    %v376 = vpack.c.bf16 %v346, %v344
    %v377 = vpack.c.bf16 %v349, %v347
    %v378 = vpack.c.bf16 %v350, %v348
    %v379 = vpack.c.bf16 %v353, %v351
    %v380 = vpack.c.bf16 %v354, %v352
    %v381 = vpack.c.bf16 %v357, %v355
    %v382 = vpack.c.bf16 %v358, %v356
    %v383 = vpack.c.bf16 %v361, %v359
    %v384 = vpack.c.bf16 %v362, %v360
    %v385 = vpack.c.bf16 %v365, %v363
    %v386 = vpack.c.bf16 %v366, %v364
    %v387 = vpack.c.bf16 %v369, %v367
    %v388 = vpack.c.bf16 %v370, %v368
    %v389 = vpack.c.bf16 %v373, %v371
    %v390 = vpack.c.bf16 %v374, %v372
    %v391 = vld [vmem:[%s3] sm:$0xf]
    %v392 = vld [vmem:[%s3 + $0x4] sm:$0xf]
    %v393 = vld [vmem:[%s3 + $0x8] sm:$0xf]
    %v394 = vld [vmem:[%s3 + $0xc] sm:$0xf]
    %v395 = vld [vmem:[%s3 + $0x10] sm:$0xf]
    %v396 = vld [vmem:[%s3 + $0x14] sm:$0xf]
    %v397 = vld [vmem:[%s3 + $0x18] sm:$0xf]
    %v398 = vld [vmem:[%s3 + $0x1c] sm:$0xf]
    %v399 = vld [vmem:[%s4] sm:$0xff]
    %v400 = vld [vmem:[%s4 + $0x8] sm:$0xff]
    %v401 = vld [vmem:[%s4 + $0x10] sm:$0xff]
    %v402 = vld [vmem:[%s4 + $0x18] sm:$0xff]
    %v403 = vld [vmem:[%s4 + $0x20] sm:$0xff]
    %v404 = vld [vmem:[%s4 + $0x28] sm:$0xff]
    %v405 = vld [vmem:[%s4 + $0x30] sm:$0xff]
    %v406 = vld [vmem:[%s4 + $0x38] sm:$0xff]
    %408 = vset.pattern.permute.xlu0 0
    %409 = vperm.xlu0 %408, %v399
    %v410 = vpop.permute.xlu0 %409
    %413 = vset.pattern.permute.xlu0 0
    %414 = vperm.xlu0 %413, %v400
    %v415 = vpop.permute.xlu0 %414
    %418 = vset.pattern.permute.xlu0 0
    %419 = vperm.xlu0 %418, %v401
    %v420 = vpop.permute.xlu0 %419
    %423 = vset.pattern.permute.xlu0 0
    %424 = vperm.xlu0 %423, %v402
    %v425 = vpop.permute.xlu0 %424
    %428 = vset.pattern.permute.xlu0 0
    %429 = vperm.xlu0 %428, %v403
    %v430 = vpop.permute.xlu0 %429
    %433 = vset.pattern.permute.xlu0 0
    %434 = vperm.xlu0 %433, %v404
    %v435 = vpop.permute.xlu0 %434
    %438 = vset.pattern.permute.xlu0 0
    %439 = vperm.xlu0 %438, %v405
    %v440 = vpop.permute.xlu0 %439
    %443 = vset.pattern.permute.xlu0 0
    %444 = vperm.xlu0 %443, %v406
    %v445 = vpop.permute.xlu0 %444
    %v455 = vunpack.c.l.b16 %v391
    %v456 = vunpack.c.l.b16 %v392
    %v457 = vunpack.c.l.b16 %v393
    %v458 = vunpack.c.l.b16 %v394
    %v459 = vunpack.c.l.b16 %v395
    %v460 = vunpack.c.l.b16 %v396
    %v461 = vunpack.c.l.b16 %v397
    %v462 = vunpack.c.l.b16 %v398
    %v463 = vpack.c.b16 %v456, %v455
    %v464 = vpack.c.b16 %v458, %v457
    %v465 = vpack.c.b16 %v460, %v459
    %v466 = vpack.c.b16 %v462, %v461
    %471 = vmatprep.subr.bf16.mxu0 %v376
    %472 = vmatpush1.bf16.msra.mxu0 %v375
    %473 = vmatprep.subr.bf16.mxu0 %v378
    %474 = vmatpush1.bf16.msra.mxu0 %v377
    %475 = vmatprep.subr.bf16.mxu0 %v380
    %476 = vmatpush1.bf16.msra.mxu0 %v379
    %477 = vmatprep.subr.bf16.mxu0 %v382
    %478 = vmatpush1.bf16.msra.mxu0 %v381
    %479 = vmatprep.subr.bf16.mxu0 %v384
    %480 = vmatpush1.bf16.msra.mxu0 %v383
    %481 = vmatprep.subr.bf16.mxu0 %v386
    %482 = vmatpush1.bf16.msra.mxu0 %v385
    %483 = vmatprep.subr.bf16.mxu0 %v388
    %484 = vmatpush1.bf16.msra.mxu0 %v387
    %485 = vmatprep.subr.bf16.mxu0 %v390
    %486 = vmatpush1.bf16.msra.mxu0 %v389
    %487 = vmatprep.subr.bf16.mxu0 0
    %488 = vmatpush1.bf16.msra.mxu0 0
    %489 = vmatprep.subr.bf16.mxu0 0
    %490 = vmatpush1.bf16.msra.mxu0 0
    %491 = vmatprep.subr.bf16.mxu0 0
    %492 = vmatpush1.bf16.msra.mxu0 0
    %493 = vmatprep.subr.bf16.mxu0 0
    %494 = vmatpush1.bf16.msra.mxu0 0
    %495 = vmatprep.subr.bf16.mxu0 0
    %496 = vmatpush1.bf16.msra.mxu0 0
    %497 = vmatprep.subr.bf16.mxu0 0
    %498 = vmatpush1.bf16.msra.mxu0 0
    %499 = vmatprep.subr.bf16.mxu0 0
    %500 = vmatpush1.bf16.msra.mxu0 0
    %501 = vmatprep.subr.bf16.mxu0 0
    %502 = vmatpush1.bf16.msra.mxu0 0
    %503 = vmatprep.mubr.bf16.mxu0 0
    %504 = vmatmul.mubr.bf16.gmra.mrb[0].mxu0 %v463
    %v505 = vpop.f32.mrb[0].mxu0
    %v506 = vadd.f32 %v410, %v505
    %v507 = vpop.f32.mrb[0].mxu0
    %v508 = vadd.f32 %v410, %v507
    %v509 = vpop.f32.mrb[0].mxu0
    %v510 = vadd.f32 %v415, %v509
    %v511 = vpop.f32.mrb[0].mxu0
    %v512 = vadd.f32 %v415, %v511
    %513 = vmatprep.mubr.bf16.mxu0 0
    %514 = vmatmul.mubr.bf16.gmra.mrb[0].mxu0 %v464
    %v515 = vpop.f32.mrb[0].mxu0
    %v516 = vadd.f32 %v420, %v515
    %v517 = vpop.f32.mrb[0].mxu0
    %v518 = vadd.f32 %v420, %v517
    %v519 = vpop.f32.mrb[0].mxu0
    %v520 = vadd.f32 %v425, %v519
    %v521 = vpop.f32.mrb[0].mxu0
    %v522 = vadd.f32 %v425, %v521
    %523 = vmatprep.mubr.bf16.mxu0 0
    %524 = vmatmul.mubr.bf16.gmra.mrb[0].mxu0 %v465
    %v525 = vpop.f32.mrb[0].mxu0
    %v526 = vadd.f32 %v430, %v525
    %v527 = vpop.f32.mrb[0].mxu0
    %v528 = vadd.f32 %v430, %v527
    %v529 = vpop.f32.mrb[0].mxu0
    %v530 = vadd.f32 %v435, %v529
    %v531 = vpop.f32.mrb[0].mxu0
    %v532 = vadd.f32 %v435, %v531
    %533 = vmatprep.mubr.bf16.mxu0 0
    %534 = vmatmul.mubr.bf16.gmra.mrb[0].mxu0 %v466
    %v535 = vpop.f32.mrb[0].mxu0
    %v536 = vadd.f32 %v440, %v535
    %v537 = vpop.f32.mrb[0].mxu0
    %v538 = vadd.f32 %v440, %v537
    %v539 = vpop.f32.mrb[0].mxu0
    %v540 = vadd.f32 %v445, %v539
    %v541 = vpop.f32.mrb[0].mxu0
    %v542 = vadd.f32 %v445, %v541
    %543 = vdwg.mxu0
    %v544 = vmax.f32 %v506, 0.0
    %v545 = vmax.f32 %v508, 0.0
    %v546 = vmax.f32 %v510, 0.0
    %v547 = vmax.f32 %v512, 0.0
    %v548 = vmax.f32 %v516, 0.0
    %v549 = vmax.f32 %v518, 0.0
    %v550 = vmax.f32 %v520, 0.0
    %v551 = vmax.f32 %v522, 0.0
    %v552 = vmax.f32 %v526, 0.0
    %v553 = vmax.f32 %v528, 0.0
    %v554 = vmax.f32 %v530, 0.0
    %v555 = vmax.f32 %v532, 0.0
    %v556 = vmax.f32 %v536, 0.0
    %v557 = vmax.f32 %v538, 0.0
    %v558 = vmax.f32 %v540, 0.0
    %v559 = vmax.f32 %v542, 0.0
    %v560 = vpack.c.bf16 %v546, %v544
    %v561 = vpack.c.bf16 %v547, %v545
    %v562 = vpack.c.bf16 %v550, %v548
    %v563 = vpack.c.bf16 %v551, %v549
    %v564 = vpack.c.bf16 %v554, %v552
    %v565 = vpack.c.bf16 %v555, %v553
    %v566 = vpack.c.bf16 %v558, %v556
    %v567 = vpack.c.bf16 %v559, %v557
    %v568 = vld [vmem:[%s5] sm:$0xf]
    %v569 = vld [vmem:[%s5 + $0x4] sm:$0xf]
    %v570 = vld [vmem:[%s5 + $0x8] sm:$0xf]
    %v571 = vld [vmem:[%s5 + $0xc] sm:$0xf]
    %v572 = vld [vmem:[%s6] sm:$0xff]
    %v573 = vld [vmem:[%s6 + $0x8] sm:$0xff]
    %v574 = vld [vmem:[%s6 + $0x10] sm:$0xff]
    %v575 = vld [vmem:[%s6 + $0x18] sm:$0xff]
    %577 = vset.pattern.permute.xlu0 0
    %578 = vperm.xlu0 %577, %v572
    %v579 = vpop.permute.xlu0 %578
    %582 = vset.pattern.permute.xlu0 0
    %583 = vperm.xlu0 %582, %v573
    %v584 = vpop.permute.xlu0 %583
    %587 = vset.pattern.permute.xlu0 0
    %588 = vperm.xlu0 %587, %v574
    %v589 = vpop.permute.xlu0 %588
    %592 = vset.pattern.permute.xlu0 0
    %593 = vperm.xlu0 %592, %v575
    %v594 = vpop.permute.xlu0 %593
    %v600 = vunpack.c.l.b16 %v568
    %v601 = vunpack.c.l.b16 %v569
    %v602 = vunpack.c.l.b16 %v570
    %v603 = vunpack.c.l.b16 %v571
    %v604 = vpack.c.b16 %v601, %v600
    %v605 = vpack.c.b16 %v603, %v602
    %vm606 = vcmask 523264
    %v608 = vsel %vm606, %v604, 0
    %v611 = vsel %vm606, %v605, 0
    %613 = vmatprep.subr.bf16.mxu0 %v561
    %614 = vmatpush1.bf16.msra.mxu0 %v560
    %615 = vmatprep.subr.bf16.mxu0 %v563
    %616 = vmatpush1.bf16.msra.mxu0 %v562
    %617 = vmatprep.subr.bf16.mxu0 %v565
    %618 = vmatpush1.bf16.msra.mxu0 %v564
    %619 = vmatprep.subr.bf16.mxu0 %v567
    %620 = vmatpush1.bf16.msra.mxu0 %v566
    %621 = vmatprep.subr.bf16.mxu0 0
    %622 = vmatpush1.bf16.msra.mxu0 0
    %623 = vmatprep.subr.bf16.mxu0 0
    %624 = vmatpush1.bf16.msra.mxu0 0
    %625 = vmatprep.subr.bf16.mxu0 0
    %626 = vmatpush1.bf16.msra.mxu0 0
    %627 = vmatprep.subr.bf16.mxu0 0
    %628 = vmatpush1.bf16.msra.mxu0 0
    %629 = vmatprep.subr.bf16.mxu0 0
    %630 = vmatpush1.bf16.msra.mxu0 0
    %631 = vmatprep.subr.bf16.mxu0 0
    %632 = vmatpush1.bf16.msra.mxu0 0
    %633 = vmatprep.subr.bf16.mxu0 0
    %634 = vmatpush1.bf16.msra.mxu0 0
    %635 = vmatprep.subr.bf16.mxu0 0
    %636 = vmatpush1.bf16.msra.mxu0 0
    %637 = vmatprep.subr.bf16.mxu0 0
    %638 = vmatpush1.bf16.msra.mxu0 0
    %639 = vmatprep.subr.bf16.mxu0 0
    %640 = vmatpush1.bf16.msra.mxu0 0
    %641 = vmatprep.subr.bf16.mxu0 0
    %642 = vmatpush1.bf16.msra.mxu0 0
    %643 = vmatprep.subr.bf16.mxu0 0
    %644 = vmatpush1.bf16.msra.mxu0 0
    %645 = vmatprep.mubr.bf16.mxu0 0
    %646 = vmatmul.mubr.bf16.gmra.mrb[0].mxu0 %v608
    %v647 = vpop.f32.mrb[0].mxu0
    %v648 = vadd.f32 %v579, %v647
    %v649 = vpop.f32.mrb[0].mxu0
    %v650 = vadd.f32 %v579, %v649
    %v651 = vpop.f32.mrb[0].mxu0
    %v652 = vadd.f32 %v584, %v651
    %v653 = vpop.f32.mrb[0].mxu0
    %v654 = vadd.f32 %v584, %v653
    %655 = vmatprep.mubr.bf16.mxu0 0
    %656 = vmatmul.mubr.bf16.gmra.mrb[0].mxu0 %v611
    %v657 = vpop.f32.mrb[0].mxu0
    %v658 = vadd.f32 %v589, %v657
    %v659 = vpop.f32.mrb[0].mxu0
    %v660 = vadd.f32 %v589, %v659
    %v661 = vpop.f32.mrb[0].mxu0
    %v662 = vadd.f32 %v594, %v661
    %v663 = vpop.f32.mrb[0].mxu0
    %v664 = vadd.f32 %v594, %v663
    %665 = vdwg.mxu0
    %v666 = vmax.f32 %v648, 0.0
    %v667 = vmax.f32 %v650, 0.0
    %v668 = vmax.f32 %v652, 0.0
    %v669 = vmax.f32 %v654, 0.0
    %v670 = vmax.f32 %v658, 0.0
    %v671 = vmax.f32 %v660, 0.0
    %v672 = vmax.f32 %v662, 0.0
    %v673 = vmax.f32 %v664, 0.0
    %v674 = vpack.c.bf16 %v668, %v666
    %v675 = vpack.c.bf16 %v669, %v667
    %v676 = vpack.c.bf16 %v672, %v670
    %v677 = vpack.c.bf16 %v673, %v671
    %v678 = vld [vmem:[%s7] sm:$0xf]
    %v679 = vld [vmem:[%s7 + $0x4] sm:$0xf]
    %v680 = vld [vmem:[%s7 + $0x8] sm:$0xf]
    %v681 = vld [vmem:[%s7 + $0xc] sm:$0xf]
    %v682 = vld [vmem:[%s8] sm:$0xff]
    %v683 = vld [vmem:[%s8 + $0x8] sm:$0xff]
    %v684 = vld [vmem:[%s8 + $0x10] sm:$0xff]
    %v685 = vld [vmem:[%s8 + $0x18] sm:$0xff]
    %687 = vset.pattern.permute.xlu0 0
    %688 = vperm.xlu0 %687, %v682
    %v689 = vpop.permute.xlu0 %688
    %692 = vset.pattern.permute.xlu0 0
    %693 = vperm.xlu0 %692, %v683
    %v694 = vpop.permute.xlu0 %693
    %697 = vset.pattern.permute.xlu0 0
    %698 = vperm.xlu0 %697, %v684
    %v699 = vpop.permute.xlu0 %698
    %702 = vset.pattern.permute.xlu0 0
    %703 = vperm.xlu0 %702, %v685
    %v704 = vpop.permute.xlu0 %703
    %v710 = vunpack.c.l.b16 %v678
    %v711 = vunpack.c.l.b16 %v679
    %v712 = vunpack.c.l.b16 %v680
    %v713 = vunpack.c.l.b16 %v681
    %v714 = vpack.c.b16 %v711, %v710
    %v715 = vpack.c.b16 %v713, %v712
    %vm716 = vcmask 261120
    %v718 = vsel %vm716, %v714, 0
    %v721 = vsel %vm716, %v715, 0
    %723 = vmatprep.subr.bf16.mxu0 %v675
    %724 = vmatpush1.bf16.msra.mxu0 %v674
    %725 = vmatprep.subr.bf16.mxu0 %v677
    %726 = vmatpush1.bf16.msra.mxu0 %v676
    %727 = vmatprep.subr.bf16.mxu0 0
    %728 = vmatpush1.bf16.msra.mxu0 0
    %729 = vmatprep.subr.bf16.mxu0 0
    %730 = vmatpush1.bf16.msra.mxu0 0
    %731 = vmatprep.subr.bf16.mxu0 0
    %732 = vmatpush1.bf16.msra.mxu0 0
    %733 = vmatprep.subr.bf16.mxu0 0
    %734 = vmatpush1.bf16.msra.mxu0 0
    %735 = vmatprep.subr.bf16.mxu0 0
    %736 = vmatpush1.bf16.msra.mxu0 0
    %737 = vmatprep.subr.bf16.mxu0 0
    %738 = vmatpush1.bf16.msra.mxu0 0
    %739 = vmatprep.subr.bf16.mxu0 0
    %740 = vmatpush1.bf16.msra.mxu0 0
    %741 = vmatprep.subr.bf16.mxu0 0
    %742 = vmatpush1.bf16.msra.mxu0 0
    %743 = vmatprep.subr.bf16.mxu0 0
    %744 = vmatpush1.bf16.msra.mxu0 0
    %745 = vmatprep.subr.bf16.mxu0 0
    %746 = vmatpush1.bf16.msra.mxu0 0
    %747 = vmatprep.subr.bf16.mxu0 0
    %748 = vmatpush1.bf16.msra.mxu0 0
    %749 = vmatprep.subr.bf16.mxu0 0
    %750 = vmatpush1.bf16.msra.mxu0 0
    %751 = vmatprep.subr.bf16.mxu0 0
    %752 = vmatpush1.bf16.msra.mxu0 0
    %753 = vmatprep.subr.bf16.mxu0 0
    %754 = vmatpush1.bf16.msra.mxu0 0
    %755 = vmatprep.mubr.bf16.mxu0 0
    %756 = vmatmul.mubr.bf16.gmra.mrb[0].mxu0 %v718
    %v757 = vpop.f32.mrb[0].mxu0
    %v758 = vadd.f32 %v689, %v757
    %v759 = vpop.f32.mrb[0].mxu0
    %v760 = vadd.f32 %v689, %v759
    %v761 = vpop.f32.mrb[0].mxu0
    %v762 = vadd.f32 %v694, %v761
    %v763 = vpop.f32.mrb[0].mxu0
    %v764 = vadd.f32 %v694, %v763
    %765 = vmatprep.mubr.bf16.mxu0 0
    %766 = vmatmul.mubr.bf16.gmra.mrb[0].mxu0 %v721
    %v767 = vpop.f32.mrb[0].mxu0
    %v768 = vadd.f32 %v699, %v767
    %v769 = vpop.f32.mrb[0].mxu0
    %v770 = vadd.f32 %v699, %v769
    %v771 = vpop.f32.mrb[0].mxu0
    %v772 = vadd.f32 %v704, %v771
    %v773 = vpop.f32.mrb[0].mxu0
    %v774 = vadd.f32 %v704, %v773
    %775 = vdwg.mxu0
    %v776 = vmax.f32 %v758, 0.0
    %v777 = vmax.f32 %v760, 0.0
    %v778 = vmax.f32 %v762, 0.0
    %v779 = vmax.f32 %v764, 0.0
    %v780 = vmax.f32 %v768, 0.0
    %v781 = vmax.f32 %v770, 0.0
    %v782 = vmax.f32 %v772, 0.0
    %v783 = vmax.f32 %v774, 0.0
    %v784 = vpack.c.bf16 %v778, %v776
    %v785 = vpack.c.bf16 %v779, %v777
    %v786 = vpack.c.bf16 %v782, %v780
    %v787 = vpack.c.bf16 %v783, %v781
    %v788 = vld [vmem:[%s9] sm:$0x3]
    %v789 = vld [vmem:[%s10] sm:$0xf]
    %791 = vset.pattern.permute.xlu0 0
    %792 = vperm.xlu0 %791, %v789
    %v793 = vpop.permute.xlu0 %792
    %v796 = vsel %vm716, %v788, 0
    %798 = vmatprep.subr.bf16.mxu0 %v785
    %799 = vmatpush1.bf16.msra.mxu0 %v784
    %800 = vmatprep.subr.bf16.mxu0 %v787
    %801 = vmatpush1.bf16.msra.mxu0 %v786
    %802 = vmatprep.subr.bf16.mxu0 0
    %803 = vmatpush1.bf16.msra.mxu0 0
    %804 = vmatprep.subr.bf16.mxu0 0
    %805 = vmatpush1.bf16.msra.mxu0 0
    %806 = vmatprep.subr.bf16.mxu0 0
    %807 = vmatpush1.bf16.msra.mxu0 0
    %808 = vmatprep.subr.bf16.mxu0 0
    %809 = vmatpush1.bf16.msra.mxu0 0
    %810 = vmatprep.subr.bf16.mxu0 0
    %811 = vmatpush1.bf16.msra.mxu0 0
    %812 = vmatprep.subr.bf16.mxu0 0
    %813 = vmatpush1.bf16.msra.mxu0 0
    %814 = vmatprep.subr.bf16.mxu0 0
    %815 = vmatpush1.bf16.msra.mxu0 0
    %816 = vmatprep.subr.bf16.mxu0 0
    %817 = vmatpush1.bf16.msra.mxu0 0
    %818 = vmatprep.subr.bf16.mxu0 0
    %819 = vmatpush1.bf16.msra.mxu0 0
    %820 = vmatprep.subr.bf16.mxu0 0
    %821 = vmatpush1.bf16.msra.mxu0 0
    %822 = vmatprep.subr.bf16.mxu0 0
    %823 = vmatpush1.bf16.msra.mxu0 0
    %824 = vmatprep.subr.bf16.mxu0 0
    %825 = vmatpush1.bf16.msra.mxu0 0
    %826 = vmatprep.subr.bf16.mxu0 0
    %827 = vmatpush1.bf16.msra.mxu0 0
    %828 = vmatprep.subr.bf16.mxu0 0
    %829 = vmatpush1.bf16.msra.mxu0 0
    %830 = vmatprep.mubr.bf16.mxu0 0
    %831 = vmatmul.mubr.bf16.gmra.mrb[0].mxu0 %v796
    %v832 = vpop.f32.mrb[0].mxu0
    %v833 = vadd.f32 %v793, %v832
    %v834 = vpop.f32.mrb[0].mxu0
    %v835 = vadd.f32 %v793, %v834
    %v836 = vpop.f32.mrb[0].mxu0
    %v837 = vpop.f32.mrb[0].mxu0
    %838 = vdwg.mxu0
    %v841 = vcombine.low %v833, %v835
    %843 = vst [vmem:[#allocation2] sm:$0xff] %v841
    // Predicated region
    $region46: #{tpu_custom_call.1} parent=1 // pred_check
      _
    $region47: #{tpu_custom_call.1} parent=1 // pred_check_branch
      %845 = sbr.rel (0) target = $region49
    $region48: #{tpu_custom_call.1} parent=1 // pred_region
      %s847 = ssub.s32 128, 128
      %848 = vsyncadd [#allocation3], %s847
      %s850 = sshll.u32 [#allocation2], 4
      %s851 = int_to_ptr.vmem [resolvable:$true] %s850
      %853 = dma.vmem_to_hbm [thread:$0]  %s851, 128, %s11, [#allocation3]
    $region49: #{tpu_custom_call.1} parent=1 // pred_fallthru
      _
    // Predicated region
    $region50: #{tpu_custom_call.1} parent=1 // pred_check
      _
    $region51: #{tpu_custom_call.1} parent=1 // pred_check_branch
      %855 = sbr.rel (0) target = $region53
    $region52: #{tpu_custom_call.1} parent=1 // pred_region
      %856 = dma.done [#allocation3], 128
    $region53: #{tpu_custom_call.1} parent=1 // pred_fallthru
      _
    %857 = vsyncpa [#allocation3], 1

</llo_original>
